<compile_context>
chip_gen: v7x
topology: tpu7x:2x2x1
jax: 0.10.0
libtpu: 0.0.40
codegen_flags: <defaults>
</compile_context>

<pallas_src>
import math
import jax
import jax.numpy as jnp
from jax.experimental import pallas as pl
from jax.experimental.pallas import tpu as pltpu


# ----------------------------------------------------------------------------
# Kernel 1 (prologue, single launch, no grid): everything grid-invariant.
#   ctx    = LayerNorm(image_prompts @ Wproj + b) * gamma + beta
#   [k|v]  = ctx @ [Wk | Wv]                  (single packed MXU matmul)
#   kq     = (k @ Wq^T) * softmax_scale       (Wq + scale folded into K)
#   wov    = Wo^T @ v^T                       (Wo folded into V)
#   tprojT = sum(Wt^T * temb, axis=-1)        (timestep projection, hoisted)
# ----------------------------------------------------------------------------
def make_prologue_kernel(scale):
    def prologue_kernel(prompts_ref, wproj_ref, bproj_ref, gamma_ref, beta_ref,
                        wkv_ref, wqT_ref, woT_ref, wtT_ref, temb_ref,
                        kq_ref, wov_ref, tprojT_ref):
        dh = wkv_ref.shape[1] // 2
        x = prompts_ref[...].astype(jnp.bfloat16)                      # (S, Din)
        y = jnp.dot(x, wproj_ref[...], preferred_element_type=jnp.float32)
        y = y + bproj_ref[...]                                         # (S, Dh) f32
        mu = jnp.mean(y, axis=-1, keepdims=True)
        var = jnp.mean((y - mu) ** 2, axis=-1, keepdims=True)
        ctx = (y - mu) * jax.lax.rsqrt(var + 1e-5)
        ctx = ctx * gamma_ref[...] + beta_ref[...]                     # f32

        kv = jnp.dot(ctx.astype(jnp.bfloat16), wkv_ref[...],
                     preferred_element_type=jnp.float32)               # (S, 2*Dh)
        k = kv[:, :dh]                                                 # (S, Dh)
        v = kv[:, dh:]                                                 # (S, Dh)

        # Fold Wq (and the softmax scale) into K, and Wo into V.
        kq = jnp.dot(k.astype(jnp.bfloat16), wqT_ref[...],
                     preferred_element_type=jnp.float32) * scale       # (S, C)
        wov = jnp.dot(woT_ref[...], v.T.astype(jnp.bfloat16),
                      preferred_element_type=jnp.float32)              # (C, S)
        kq_ref[...] = kq.astype(kq_ref.dtype)
        wov_ref[...] = wov.astype(wov_ref.dtype)

        # timestep projection: (C, Dt) * (1, Dt) broadcast, reduce over lanes.
        tprojT_ref[...] = jnp.sum(
            wtT_ref[...].astype(jnp.float32) * temb_ref[...],
            axis=-1, keepdims=True)                                    # (C, 1)
    return prologue_kernel


def prologue(prompts, wproj, bproj, gamma, beta, wkv, wqT, woT, wtT, temb):
    S = prompts.shape[0]
    dh = wkv.shape[1] // 2
    C = wtT.shape[0]
    scale = 1.0 / math.sqrt(dh)
    return pl.pallas_call(
        make_prologue_kernel(scale),
        out_shape=(jax.ShapeDtypeStruct((S, C), jnp.bfloat16),   # kq
                   jax.ShapeDtypeStruct((C, S), jnp.bfloat16),   # wov
                   jax.ShapeDtypeStruct((C, 1), jnp.float32)),   # tprojT
    )(prompts, wproj, bproj, gamma, beta, wkv, wqT, woT, wtT, temb)


# ----------------------------------------------------------------------------
# Kernel 2: denoising hot path, token grid.  Tokens on the lane axis, channels
# on sublanes; only two matmuls remain (contractions over C and over S), so
# the kernel streams (C, tile) in / (C, tile) out and is memory-bound.
# ----------------------------------------------------------------------------
def make_denoise_kernel(approx_recip):
    def denoise_kernel(xT_ref, kq_ref, wov_ref, tprojT_ref, o_ref):
        xT = xT_ref[...]                                               # (C, T)
        sT = jnp.dot(kq_ref[...], xT.astype(jnp.bfloat16),
                     preferred_element_type=jnp.float32)               # (S, T)
        sT = sT - jnp.max(sT, axis=0, keepdims=True)
        p = jnp.exp(sT)
        denom = jnp.sum(p, axis=0, keepdims=True)
        if approx_recip:
            p = p * pl.reciprocal(denom, approx=True)
        else:
            p = p / denom
        outT = jnp.dot(wov_ref[...], p.astype(jnp.bfloat16),
                       preferred_element_type=jnp.float32)             # (C, T)
        o_ref[...] = (xT.astype(jnp.float32) + outT
                      + tprojT_ref[...]).astype(o_ref.dtype)
    return denoise_kernel


def denoise(xT, kq, wov, tprojT, *, token_tile=2048, approx_recip=True):
    C, N = xT.shape
    S = kq.shape[0]
    # Lane-dense tiling, no host-side pad/slice: a ragged last block (if any)
    # is masked by Pallas.  Prefer >=2 grid steps so ("parallel",) can feed
    # both TensorCores on v7x megacore.
    if N % 128 != 0 or N <= 128:
        tile = N                                   # single full-extent block
    else:
        tile = min(token_tile, N)
        if tile == N and N >= 256:
            tile = max(128, (pl.cdiv(N, 2) // 128) * 128)
    grid = (pl.cdiv(N, tile),)
    return pl.pallas_call(
        make_denoise_kernel(approx_recip),
        out_shape=jax.ShapeDtypeStruct((C, N), xT.dtype),
        grid=grid,
        in_specs=[
            pl.BlockSpec((C, tile), lambda i: (0, i)),   # latent tokens
            pl.BlockSpec((S, C), lambda i: (0, 0)),      # kq   (grid-invariant)
            pl.BlockSpec((C, S), lambda i: (0, 0)),      # wov  (grid-invariant)
            pl.BlockSpec((C, 1), lambda i: (0, 0)),      # timestep projection
        ],
        out_specs=pl.BlockSpec((C, tile), lambda i: (0, i)),
        compiler_params=pltpu.CompilerParams(
            dimension_semantics=("parallel",),
            # 48 MiB: headroom inside v7x's 64 MiB/TC, enough for
            # double-buffered f32 (C, 2048) in/out blocks on v5e/v6e.
            vmem_limit_bytes=48 * 1024 * 1024),
    )(xT, kq, wov, tprojT)


# ----------------------------------------------------------------------------
# Glue: sinusoidal timestep embedding (plain JAX, tiny).
# [cos, sin] ordering matches diffusers' Timesteps(flip_sin_to_cos=True) as
# used by the SD UNet.
# ----------------------------------------------------------------------------
def timestep_embedding(timestep, dim):
    half = dim // 2
    freqs = jnp.exp(-math.log(10000.0) * jnp.arange(half, dtype=jnp.float32) / half)
    args = jnp.asarray(timestep, jnp.float32) * freqs
    return jnp.concatenate([jnp.cos(args), jnp.sin(args)])[None, :]   # (1, dim)


# ----------------------------------------------------------------------------
# MagicAnimate (synthetic, deterministic weights)
# ----------------------------------------------------------------------------
class MagicAnimatePallas:
    def __init__(self, latent_channels=4, prompt_dim=64, hidden_dim=32,
                 temb_dim=32, seed=0):
        self.C = latent_channels
        self.Dh = hidden_dim
        self.Dt = temb_dim
        keys = jax.random.split(jax.random.PRNGKey(seed), 8)
        s = 0.02
        # image_proj_model: Linear(prompt_dim -> hidden_dim) + LayerNorm(g, b)
        self.proj_w = (s * jax.random.normal(keys[0], (prompt_dim, hidden_dim),
                                             jnp.float32)).astype(jnp.bfloat16)
        self.proj_b = jnp.zeros((1, hidden_dim), jnp.float32)
        self.ln_gamma = jnp.ones((1, hidden_dim), jnp.float32)
        self.ln_beta = jnp.zeros((1, hidden_dim), jnp.float32)
        # cross-attention weights, stored pre-transposed / pre-packed for the
        # prologue fold, bf16 for MXU.
        wq = s * jax.random.normal(keys[1], (latent_channels, hidden_dim), jnp.float32)
        wk = s * jax.random.normal(keys[2], (hidden_dim, hidden_dim), jnp.float32)
        wv = s * jax.random.normal(keys[3], (hidden_dim, hidden_dim), jnp.float32)
        wo = s * jax.random.normal(keys[4], (hidden_dim, latent_channels), jnp.float32)
        wt = s * jax.random.normal(keys[5], (temb_dim, latent_channels), jnp.float32)
        self.wqT = wq.T.astype(jnp.bfloat16)                               # (Dh, C)
        self.wkv = jnp.concatenate([wk, wv], axis=1).astype(jnp.bfloat16)  # (Dh, 2Dh)
        self.woT = wo.T.astype(jnp.bfloat16)                               # (C, Dh)
        self.wtT = wt.T.astype(jnp.bfloat16)                               # (C, Dt)

    def forward(self, init_latents, image_prompts, timestep,
                source_image, motion_sequence, random_seed):
        # shape checks mirroring the PyTorch forward
        B, C, F, H, W = init_latents.shape
        assert C == self.C
        assert B == 1, "synthetic kernel handles batch=1 (train_batch_size=1)"
        Hs, Ws, Cs = source_image.shape            # H, W, C = source_image.shape
        video_length = motion_sequence.shape[1]    # control.shape[1]
        del Hs, Ws, Cs, video_length, random_seed
        # TODO(synk): controlnet / appearance-encoder / VAE paths require their
        # pretrained definitions and are not consumed by compute.

        temb = timestep_embedding(timestep, self.Dt)                  # (1, Dt)

        # 1) image_prompts = unet.image_proj_model(image_prompts), fused with
        #    the grid-invariant K/V/Wq/Wo/timestep folds (one tiny launch).
        if image_prompts is not None:
            assert image_prompts.shape[0] == 1, "prompt batch must be 1"
            S, Din = image_prompts.shape[1], image_prompts.shape[2]
            prompts = image_prompts.reshape(S, Din).astype(jnp.float32)
            kq, wov, tprojT = prologue(prompts, self.proj_w, self.proj_b,
                                       self.ln_gamma, self.ln_beta,
                                       self.wkv, self.wqT, self.woT,
                                       self.wtT, temb)
        else:
            S = 8
            kq = jnp.zeros((S, self.C), jnp.bfloat16)
            wov = jnp.zeros((self.C, S), jnp.bfloat16)
            tprojT = jnp.sum(self.wtT.astype(jnp.float32) * temb,
                             axis=-1, keepdims=True)

        # 2) noise_pred = pipeline.train(...) — representative denoise hot path.
        # NCFHW -> (C, tokens): channels on sublanes, tokens on lanes.
        # Dtype is passed through untouched (no extra HBM cast pass); hand in
        # bf16 latents to halve token bandwidth.
        xT = init_latents[0].reshape(C, F * H * W)
        outT = denoise(xT, kq, wov, tprojT)
        noise_pred = outT.reshape(1, C, F, H, W)                      # back to NCFHW
        return noise_pred


if __name__ == "__main__":
    key = jax.random.PRNGKey(0)
    k1, k2, k3, k4 = jax.random.split(key, 4)

    B, C, F, H, W = 1, 4, 4, 8, 8
    init_latents = jax.random.normal(k1, (B, C, F, H, W), jnp.float32)
    image_prompts = jax.random.normal(k2, (B, 8, 64), jnp.float32)
    timestep = jnp.array(500, jnp.int32)
    source_image = jax.random.uniform(k3, (64, 64, 3), jnp.float32) * 255.0
    motion_sequence = jax.random.uniform(k4, (B, F, 3, 64, 64), jnp.float32) * 255.0

    model = MagicAnimatePallas(latent_channels=C, prompt_dim=64,
                               hidden_dim=32, temb_dim=32, seed=0)
    noise_pred = model.forward(init_latents, image_prompts, timestep,
                               source_image, motion_sequence, random_seed=42)
    jax.block_until_ready(noise_pred)
    assert noise_pred.shape == init_latents.shape
    assert noise_pred.dtype == jnp.float32
    assert bool(jnp.all(jnp.isfinite(noise_pred)))
    print("KERNEL_OK")
</pallas_src>

<mosaic_0001>
module attributes {stable_mosaic.version = 11 : i64} {
  func.func @prologue_kernel(%arg0: memref<8x64xf32, #tpu.memory_space<vmem>>, %arg1: memref<64x32xbf16, #tpu.memory_space<vmem>>, %arg2: memref<1x32xf32, #tpu.memory_space<vmem>>, %arg3: memref<1x32xf32, #tpu.memory_space<vmem>>, %arg4: memref<1x32xf32, #tpu.memory_space<vmem>>, %arg5: memref<32x64xbf16, #tpu.memory_space<vmem>>, %arg6: memref<32x4xbf16, #tpu.memory_space<vmem>>, %arg7: memref<4x32xbf16, #tpu.memory_space<vmem>>, %arg8: memref<4x32xbf16, #tpu.memory_space<vmem>>, %arg9: memref<1x32xf32, #tpu.memory_space<vmem>>, %arg10: memref<8x4xbf16, #tpu.memory_space<vmem>>, %arg11: memref<4x8xbf16, #tpu.memory_space<vmem>>, %arg12: memref<4x1xf32, #tpu.memory_space<vmem>>) attributes {dimension_semantics = [], scalar_prefetch = 0 : i64, scratch_operands = 0 : i64, tpu.core_type = #tpu.core_type<tc>} {
    %c0 = arith.constant 0 : index
    %c0_0 = arith.constant 0 : index
    %0 = vector.load %arg0[%c0, %c0_0] : memref<8x64xf32, #tpu.memory_space<vmem>>, vector<8x64xf32>
    %1 = arith.truncf %0 : vector<8x64xf32> to vector<8x64xbf16>
    %c0_1 = arith.constant 0 : index
    %c0_2 = arith.constant 0 : index
    %2 = vector.load %arg1[%c0_1, %c0_2] : memref<64x32xbf16, #tpu.memory_space<vmem>>, vector<64x32xbf16>
    %cst = arith.constant dense<0.000000e+00> : vector<8x32xf32>
    %3 = tpu.matmul %1, %2, %cst {dimension_numbers = #tpu.dot_dimension_numbers<[1], [0], [0], [1], [0, 0, 1, 1], [], []>} : vector<8x64xbf16>, vector<64x32xbf16>, vector<8x32xf32> -> vector<8x32xf32>
    %c0_3 = arith.constant 0 : index
    %c0_4 = arith.constant 0 : index
    %4 = vector.load %arg2[%c0_3, %c0_4] : memref<1x32xf32, #tpu.memory_space<vmem>>, vector<1x32xf32>
    %5 = vector.broadcast %4 : vector<1x32xf32> to vector<8x32xf32>
    %6 = arith.addf %3, %5 : vector<8x32xf32>
    %cst_5 = arith.constant dense<0.000000e+00> : vector<8xf32>
    %7 = vector.multi_reduction <add>, %6, %cst_5 [1] : vector<8x32xf32> to vector<8xf32>
    %8 = vector.shape_cast %7 : vector<8xf32> to vector<8x1xf32>
    %cst_6 = arith.constant 3.200000e+01 : f32
    %9 = vector.broadcast %cst_6 : f32 to vector<8x1xf32>
    %10 = arith.divf %8, %9 : vector<8x1xf32>
    %11 = vector.broadcast %10 : vector<8x1xf32> to vector<8x32xf32>
    %12 = arith.subf %6, %11 : vector<8x32xf32>
    %13 = arith.mulf %12, %12 : vector<8x32xf32>
    %cst_7 = arith.constant dense<0.000000e+00> : vector<8xf32>
    %14 = vector.multi_reduction <add>, %13, %cst_7 [1] : vector<8x32xf32> to vector<8xf32>
    %15 = vector.shape_cast %14 : vector<8xf32> to vector<8x1xf32>
    %cst_8 = arith.constant 3.200000e+01 : f32
    %16 = vector.broadcast %cst_8 : f32 to vector<8x1xf32>
    %17 = arith.divf %15, %16 : vector<8x1xf32>
    %18 = vector.broadcast %10 : vector<8x1xf32> to vector<8x32xf32>
    %19 = arith.subf %6, %18 : vector<8x32xf32>
    %cst_9 = arith.constant 9.99999974E-6 : f32
    %20 = vector.broadcast %cst_9 : f32 to vector<8x1xf32>
    %21 = arith.addf %17, %20 : vector<8x1xf32>
    %22 = math.rsqrt %21 : vector<8x1xf32>
    %23 = vector.broadcast %22 : vector<8x1xf32> to vector<8x32xf32>
    %24 = arith.mulf %19, %23 : vector<8x32xf32>
    %c0_10 = arith.constant 0 : index
    %c0_11 = arith.constant 0 : index
    %25 = vector.load %arg3[%c0_10, %c0_11] : memref<1x32xf32, #tpu.memory_space<vmem>>, vector<1x32xf32>
    %26 = vector.broadcast %25 : vector<1x32xf32> to vector<8x32xf32>
    %27 = arith.mulf %24, %26 : vector<8x32xf32>
    %c0_12 = arith.constant 0 : index
    %c0_13 = arith.constant 0 : index
    %28 = vector.load %arg4[%c0_12, %c0_13] : memref<1x32xf32, #tpu.memory_space<vmem>>, vector<1x32xf32>
    %29 = vector.broadcast %28 : vector<1x32xf32> to vector<8x32xf32>
    %30 = arith.addf %27, %29 : vector<8x32xf32>
    %31 = arith.truncf %30 : vector<8x32xf32> to vector<8x32xbf16>
    %c0_14 = arith.constant 0 : index
    %c0_15 = arith.constant 0 : index
    %32 = vector.load %arg5[%c0_14, %c0_15] : memref<32x64xbf16, #tpu.memory_space<vmem>>, vector<32x64xbf16>
    %cst_16 = arith.constant dense<0.000000e+00> : vector<8x64xf32>
    %33 = tpu.matmul %31, %32, %cst_16 {dimension_numbers = #tpu.dot_dimension_numbers<[1], [0], [0], [1], [0, 0, 1, 1], [], []>} : vector<8x32xbf16>, vector<32x64xbf16>, vector<8x64xf32> -> vector<8x64xf32>
    %34 = vector.extract_strided_slice %33 {offsets = [0, 0], sizes = [8, 32], strides = [1, 1]} : vector<8x64xf32> to vector<8x32xf32>
    %35 = vector.extract_strided_slice %33 {offsets = [0, 32], sizes = [8, 32], strides = [1, 1]} : vector<8x64xf32> to vector<8x32xf32>
    %36 = arith.truncf %34 : vector<8x32xf32> to vector<8x32xbf16>
    %c0_17 = arith.constant 0 : index
    %c0_18 = arith.constant 0 : index
    %37 = vector.load %arg6[%c0_17, %c0_18] : memref<32x4xbf16, #tpu.memory_space<vmem>>, vector<32x4xbf16>
    %cst_19 = arith.constant dense<0.000000e+00> : vector<8x4xf32>
    %38 = tpu.matmul %36, %37, %cst_19 {dimension_numbers = #tpu.dot_dimension_numbers<[1], [0], [0], [1], [0, 0, 1, 1], [], []>} : vector<8x32xbf16>, vector<32x4xbf16>, vector<8x4xf32> -> vector<8x4xf32>
    %cst_20 = arith.constant 0.176776692 : f32
    %39 = vector.broadcast %cst_20 : f32 to vector<8x4xf32>
    %40 = arith.mulf %38, %39 : vector<8x4xf32>
    %c0_21 = arith.constant 0 : index
    %c0_22 = arith.constant 0 : index
    %41 = vector.load %arg7[%c0_21, %c0_22] : memref<4x32xbf16, #tpu.memory_space<vmem>>, vector<4x32xbf16>
    %42 = tpu.transpose %35, [1, 0] : vector<8x32xf32> -> vector<32x8xf32>
    %43 = arith.truncf %42 : vector<32x8xf32> to vector<32x8xbf16>
    %cst_23 = arith.constant dense<0.000000e+00> : vector<4x8xf32>
    %44 = tpu.matmul %41, %43, %cst_23 {dimension_numbers = #tpu.dot_dimension_numbers<[1], [0], [0], [1], [0, 0, 1, 1], [], []>} : vector<4x32xbf16>, vector<32x8xbf16>, vector<4x8xf32> -> vector<4x8xf32>
    %45 = arith.truncf %40 : vector<8x4xf32> to vector<8x4xbf16>
    %c0_24 = arith.constant 0 : index
    %c0_25 = arith.constant 0 : index
    %46 = vector.load %arg10[%c0_24, %c0_25] : memref<8x4xbf16, #tpu.memory_space<vmem>>, vector<8x4xbf16>
    tpu.vector_store %arg10[%c0_24, %c0_25], %45 {strides = array<i32>} : memref<8x4xbf16, #tpu.memory_space<vmem>>, vector<8x4xbf16>,
    %47 = arith.truncf %44 : vector<4x8xf32> to vector<4x8xbf16>
    %c0_26 = arith.constant 0 : index
    %c0_27 = arith.constant 0 : index
    %48 = vector.load %arg11[%c0_26, %c0_27] : memref<4x8xbf16, #tpu.memory_space<vmem>>, vector<4x8xbf16>
    tpu.vector_store %arg11[%c0_26, %c0_27], %47 {strides = array<i32>} : memref<4x8xbf16, #tpu.memory_space<vmem>>, vector<4x8xbf16>,
    %c0_28 = arith.constant 0 : index
    %c0_29 = arith.constant 0 : index
    %49 = vector.load %arg8[%c0_28, %c0_29] : memref<4x32xbf16, #tpu.memory_space<vmem>>, vector<4x32xbf16>
    %50 = arith.extf %49 : vector<4x32xbf16> to vector<4x32xf32>
    %c0_30 = arith.constant 0 : index
    %c0_31 = arith.constant 0 : index
    %51 = vector.load %arg9[%c0_30, %c0_31] : memref<1x32xf32, #tpu.memory_space<vmem>>, vector<1x32xf32>
    %52 = vector.broadcast %51 : vector<1x32xf32> to vector<4x32xf32>
    %53 = arith.mulf %50, %52 : vector<4x32xf32>
    %cst_32 = arith.constant dense<0.000000e+00> : vector<4xf32>
    %54 = vector.multi_reduction <add>, %53, %cst_32 [1] : vector<4x32xf32> to vector<4xf32>
    %55 = vector.shape_cast %54 : vector<4xf32> to vector<4x1xf32>
    %c0_33 = arith.constant 0 : index
    %c0_34 = arith.constant 0 : index
    %56 = vector.load %arg12[%c0_33, %c0_34] : memref<4x1xf32, #tpu.memory_space<vmem>>, vector<4x1xf32>
    tpu.vector_store %arg12[%c0_33, %c0_34], %55 {strides = array<i32>} : memref<4x1xf32, #tpu.memory_space<vmem>>, vector<4x1xf32>,
    return
  }
}

</mosaic_0001>

<llo_original>
// kernel: tpu_custom_call.1
$region0: #{tpu_custom_call.1}
  #allocation0 [shape = 'u32[]', space=smem, size = 0x4, offset = 0x4, fixed_abs, tag = 'smem constant byte address 0x4 - core index']
  #allocation1 [shape = 'u32[144,128]{1,0:T(1,128)}', space=vmem, size = 0x12000, scoped, tag = 'internal scratch']
  %s0 = inlined_call_operand.vmem [shape: f32[8,64], index: 0, kind: input, shape index: {}]
  %s1 = inlined_call_operand.vmem [shape: bf16[64,32], index: 1, kind: input, shape index: {}]
  %s2 = inlined_call_operand.vmem [shape: f32[1,32], index: 2, kind: input, shape index: {}]
  %s3 = inlined_call_operand.vmem [shape: f32[1,32], index: 3, kind: input, shape index: {}]
  %s4 = inlined_call_operand.vmem [shape: f32[1,32], index: 4, kind: input, shape index: {}]
  %s5 = inlined_call_operand.vmem [shape: bf16[32,64], index: 5, kind: input, shape index: {}]
  %s6 = inlined_call_operand.vmem [shape: bf16[32,4], index: 6, kind: input, shape index: {}]
  %s7 = inlined_call_operand.vmem [shape: bf16[4,32], index: 7, kind: input, shape index: {}]
  %s8 = inlined_call_operand.vmem [shape: bf16[4,32], index: 8, kind: input, shape index: {}]
  %s9 = inlined_call_operand.vmem [shape: f32[1,32], index: 9, kind: input, shape index: {}]
  %s10 = inlined_call_operand.vmem [shape: bf16[8,4], index: 10, kind: output, shape index: {0}]
  %s11 = inlined_call_operand.hbm [shape: bf16[4,8], index: 11, kind: output, shape index: {1}]
  %s12 = inlined_call_operand.vmem [shape: f32[4,1], index: 12, kind: output, shape index: {2}]
  %13 = xla_tuple %s10, %s11, %s12
  %s14 = sld [smem:[#allocation0]]
  $region66: #{tpu_custom_call.1} parent=0
    _
  %s16 = ssub.s32 1, %s14
  %s17 = scalar_select 0, %s16, %s14
  $region1: #{tpu_custom_call.1} parent=0
    #allocation2 [shape = 'u8[1024]{0}', space=vmem, size = 0x400, scoped, tag = 'output window, operand 1, single buffered']
    #allocation3 [shape = 's32[1]{0}', space=sflag, size = 0x4, scoped, tag = 'scoped memory for tpu_custom_call.1']
    %18 = vsyncpa [#allocation3], 0
    // Predicated region
    $region2: #{tpu_custom_call.1} parent=1 // pred_check
      _
    $region3: #{tpu_custom_call.1} parent=1 // pred_check_branch
      %20 = sbr.rel (0) target = $region5
    $region4: #{tpu_custom_call.1} parent=1 // pred_region
      _
    $region5: #{tpu_custom_call.1} parent=1 // pred_fallthru
      _
    // Predicated region
    $region6: #{tpu_custom_call.1} parent=1 // pred_check
      _
    $region7: #{tpu_custom_call.1} parent=1 // pred_check_branch
      %22 = sbr.rel (0) target = $region9
    $region8: #{tpu_custom_call.1} parent=1 // pred_region
      _
    $region9: #{tpu_custom_call.1} parent=1 // pred_fallthru
      _
    // Predicated region
    $region10: #{tpu_custom_call.1} parent=1 // pred_check
      _
    $region11: #{tpu_custom_call.1} parent=1 // pred_check_branch
      %24 = sbr.rel (0) target = $region13
    $region12: #{tpu_custom_call.1} parent=1 // pred_region
      _
    $region13: #{tpu_custom_call.1} parent=1 // pred_fallthru
      _
    // Predicated region
    $region14: #{tpu_custom_call.1} parent=1 // pred_check
      _
    $region15: #{tpu_custom_call.1} parent=1 // pred_check_branch
      %26 = sbr.rel (0) target = $region17
    $region16: #{tpu_custom_call.1} parent=1 // pred_region
      _
    $region17: #{tpu_custom_call.1} parent=1 // pred_fallthru
      _
    // Predicated region
    $region18: #{tpu_custom_call.1} parent=1 // pred_check
      _
    $region19: #{tpu_custom_call.1} parent=1 // pred_check_branch
      %28 = sbr.rel (0) target = $region21
    $region20: #{tpu_custom_call.1} parent=1 // pred_region
      _
    $region21: #{tpu_custom_call.1} parent=1 // pred_fallthru
      _
    // Predicated region
    $region22: #{tpu_custom_call.1} parent=1 // pred_check
      _
    $region23: #{tpu_custom_call.1} parent=1 // pred_check_branch
      %30 = sbr.rel (0) target = $region25
    $region24: #{tpu_custom_call.1} parent=1 // pred_region
      _
    $region25: #{tpu_custom_call.1} parent=1 // pred_fallthru
      _
    // Predicated region
    $region26: #{tpu_custom_call.1} parent=1 // pred_check
      _
    $region27: #{tpu_custom_call.1} parent=1 // pred_check_branch
      %32 = sbr.rel (0) target = $region29
    $region28: #{tpu_custom_call.1} parent=1 // pred_region
      _
    $region29: #{tpu_custom_call.1} parent=1 // pred_fallthru
      _
    // Predicated region
    $region30: #{tpu_custom_call.1} parent=1 // pred_check
      _
    $region31: #{tpu_custom_call.1} parent=1 // pred_check_branch
      %34 = sbr.rel (0) target = $region33
    $region32: #{tpu_custom_call.1} parent=1 // pred_region
      _
    $region33: #{tpu_custom_call.1} parent=1 // pred_fallthru
      _
    // Predicated region
    $region34: #{tpu_custom_call.1} parent=1 // pred_check
      _
    $region35: #{tpu_custom_call.1} parent=1 // pred_check_branch
      %36 = sbr.rel (0) target = $region37
    $region36: #{tpu_custom_call.1} parent=1 // pred_region
      _
    $region37: #{tpu_custom_call.1} parent=1 // pred_fallthru
      _
    // Predicated region
    $region38: #{tpu_custom_call.1} parent=1 // pred_check
      _
    $region39: #{tpu_custom_call.1} parent=1 // pred_check_branch
      %38 = sbr.rel (0) target = $region41
    $region40: #{tpu_custom_call.1} parent=1 // pred_region
      _
    $region41: #{tpu_custom_call.1} parent=1 // pred_fallthru
      _
    %v40 = vld [vmem:[%s0] sm:$0xff]
    %v41 = vpack.c.bf16 %v40, %v40
    %v42 = vld [vmem:[%s1] sm:$0xf]
    %v43 = vld [vmem:[%s1 + $0x4] sm:$0xf]
    %v44 = vld [vmem:[%s1 + $0x8] sm:$0xf]
    %v45 = vld [vmem:[%s1 + $0xc] sm:$0xf]
    %v46 = vld [vmem:[%s1 + $0x10] sm:$0xf]
    %v47 = vld [vmem:[%s1 + $0x14] sm:$0xf]
    %v48 = vld [vmem:[%s1 + $0x18] sm:$0xf]
    %v49 = vld [vmem:[%s1 + $0x1c] sm:$0xf]
    %v50 = vld [vmem:[%s2] sm:$0x1]
    %v52 = vlaneseq
    %v53 = vshrl.u32 %v52, 7
    %v54 = vsub.s32 0, %v53
    %v55 = vrot.slane %v50, %v54
    %v65 = vunpack.c.l.b16 %v42
    %v66 = vunpack.c.l.b16 %v43
    %v67 = vunpack.c.l.b16 %v44
    %v68 = vunpack.c.l.b16 %v45
    %v69 = vunpack.c.l.b16 %v46
    %v70 = vunpack.c.l.b16 %v47
    %v71 = vunpack.c.l.b16 %v48
    %v72 = vunpack.c.l.b16 %v49
    %v73 = vpack.c.b16 %v66, %v65
    %v74 = vpack.c.b16 %v68, %v67
    %v75 = vpack.c.b16 %v70, %v69
    %v76 = vpack.c.b16 %v72, %v71
    %vm81 = vcmask 523264
    %v83 = vsel %vm81, %v41, 0
    %85 = vmatprep.subr.bf16.mxu0 0
    %86 = vmatpush1.bf16.msra.mxu0 %v73
    %87 = vmatprep.subr.bf16.mxu0 0
    %88 = vmatpush1.bf16.msra.mxu0 %v74
    %89 = vmatprep.subr.bf16.mxu0 0
    %90 = vmatpush1.bf16.msra.mxu0 %v75
    %91 = vmatprep.subr.bf16.mxu0 0
    %92 = vmatpush1.bf16.msra.mxu0 %v76
    %93 = vmatprep.subr.bf16.mxu0 0
    %94 = vmatpush1.bf16.msra.mxu0 0
    %95 = vmatprep.subr.bf16.mxu0 0
    %96 = vmatpush1.bf16.msra.mxu0 0
    %97 = vmatprep.subr.bf16.mxu0 0
    %98 = vmatpush1.bf16.msra.mxu0 0
    %99 = vmatprep.subr.bf16.mxu0 0
    %100 = vmatpush1.bf16.msra.mxu0 0
    %101 = vmatprep.subr.bf16.mxu0 0
    %102 = vmatpush1.bf16.msra.mxu0 0
    %103 = vmatprep.subr.bf16.mxu0 0
    %104 = vmatpush1.bf16.msra.mxu0 0
    %105 = vmatprep.subr.bf16.mxu0 0
    %106 = vmatpush1.bf16.msra.mxu0 0
    %107 = vmatprep.subr.bf16.mxu0 0
    %108 = vmatpush1.bf16.msra.mxu0 0
    %109 = vmatprep.subr.bf16.mxu0 0
    %110 = vmatpush1.bf16.msra.mxu0 0
    %111 = vmatprep.subr.bf16.mxu0 0
    %112 = vmatpush1.bf16.msra.mxu0 0
    %113 = vmatprep.subr.bf16.mxu0 0
    %114 = vmatpush1.bf16.msra.mxu0 0
    %115 = vmatprep.subr.bf16.mxu0 0
    %116 = vmatpush1.bf16.msra.mxu0 0
    %117 = vmatprep.mubr.bf16.mxu0 0
    %118 = vmatmul.mubr.bf16.gmra.mrb[0].mxu0 %v83
    %v119 = vpop.f32.mrb[0].mxu0
    %v120 = vadd.f32 %v55, %v119
    %v121 = vpop.f32.mrb[0].mxu0
    %v122 = vpop.f32.mrb[0].mxu0
    %v123 = vpop.f32.mrb[0].mxu0
    %124 = vdwg.mxu0
    %vm125 = vcmask 261120
    %v126 = vsel %vm125, %v120, 0.0
    %127 = vadd.xlane.f32.xlu0 %v126
    %v128 = vpop.xlane.xlu0 %127
    %v129 = vrcp.pop 32.0
    %v130 = vmul.f32 %v128, %v129
    %v131 = vsub.f32 %v120, %v130
    %v132 = vmul.f32 %v131, %v131
    %v133 = vsel %vm125, %v132, 0.0
    %134 = vadd.xlane.f32.xlu0 %v133
    %v135 = vpop.xlane.xlu0 %134
    %v136 = vmul.f32 %v135, %v129
    %v137 = vadd.f32 %v136, 1e-05
    %v138 = vrsqrt.pop %v137
    %v139 = vmul.f32 %v131, %v138
    %v140 = vld [vmem:[%s3] sm:$0x1]
    %v142 = vlaneseq
    %v143 = vshrl.u32 %v142, 7
    %v144 = vsub.s32 0, %v143
    %v145 = vrot.slane %v140, %v144
    %v147 = vmul.f32 %v139, %v145
    %v148 = vld [vmem:[%s4] sm:$0x1]
    %v150 = vlaneseq
    %v151 = vshrl.u32 %v150, 7
    %v152 = vsub.s32 0, %v151
    %v153 = vrot.slane %v148, %v152
    %v155 = vadd.f32 %v147, %v153
    %v156 = vpack.c.bf16 %v155, %v155
    %v157 = vld [vmem:[%s5] sm:$0xf]
    %v158 = vld [vmem:[%s5 + $0x4] sm:$0xf]
    %v159 = vld [vmem:[%s5 + $0x8] sm:$0xf]
    %v160 = vld [vmem:[%s5 + $0xc] sm:$0xf]
    %v165 = vunpack.c.l.b16 %v157
    %v166 = vunpack.c.l.b16 %v158
    %v167 = vunpack.c.l.b16 %v159
    %v168 = vunpack.c.l.b16 %v160
    %v169 = vpack.c.b16 %v166, %v165
    %v170 = vpack.c.b16 %v168, %v167
    %v174 = vsel %vm125, %v156, 0
    %176 = vmatprep.subr.bf16.mxu0 0
    %177 = vmatpush1.bf16.msra.mxu0 %v169
    %178 = vmatprep.subr.bf16.mxu0 0
    %179 = vmatpush1.bf16.msra.mxu0 %v170
    %180 = vmatprep.subr.bf16.mxu0 0
    %181 = vmatpush1.bf16.msra.mxu0 0
    %182 = vmatprep.subr.bf16.mxu0 0
    %183 = vmatpush1.bf16.msra.mxu0 0
    %184 = vmatprep.subr.bf16.mxu0 0
    %185 = vmatpush1.bf16.msra.mxu0 0
    %186 = vmatprep.subr.bf16.mxu0 0
    %187 = vmatpush1.bf16.msra.mxu0 0
    %188 = vmatprep.subr.bf16.mxu0 0
    %189 = vmatpush1.bf16.msra.mxu0 0
    %190 = vmatprep.subr.bf16.mxu0 0
    %191 = vmatpush1.bf16.msra.mxu0 0
    %192 = vmatprep.subr.bf16.mxu0 0
    %193 = vmatpush1.bf16.msra.mxu0 0
    %194 = vmatprep.subr.bf16.mxu0 0
    %195 = vmatpush1.bf16.msra.mxu0 0
    %196 = vmatprep.subr.bf16.mxu0 0
    %197 = vmatpush1.bf16.msra.mxu0 0
    %198 = vmatprep.subr.bf16.mxu0 0
    %199 = vmatpush1.bf16.msra.mxu0 0
    %200 = vmatprep.subr.bf16.mxu0 0
    %201 = vmatpush1.bf16.msra.mxu0 0
    %202 = vmatprep.subr.bf16.mxu0 0
    %203 = vmatpush1.bf16.msra.mxu0 0
    %204 = vmatprep.subr.bf16.mxu0 0
    %205 = vmatpush1.bf16.msra.mxu0 0
    %206 = vmatprep.subr.bf16.mxu0 0
    %207 = vmatpush1.bf16.msra.mxu0 0
    %208 = vmatprep.mubr.bf16.mxu0 0
    %209 = vmatmul.mubr.bf16.gmra.mrb[0].mxu0 %v174
    %v210 = vpop.f32.mrb[0].mxu0
    %v211 = vadd.f32 0.0, %v210
    %v212 = vpop.f32.mrb[0].mxu0
    %v213 = vpop.f32.mrb[0].mxu0
    %v214 = vpop.f32.mrb[0].mxu0
    %215 = vdwg.mxu0
    %v216 = vpack.c.bf16 %v211, %v211
    %v217 = vld [vmem:[%s6] sm:$0xf]
    %v218 = vld [vmem:[%s6 + $0x4] sm:$0xf]
    %v219 = vld [vmem:[%s6 + $0x8] sm:$0xf]
    %v220 = vld [vmem:[%s6 + $0xc] sm:$0xf]
    %v225 = vunpack.c.l.b16 %v217
    %v226 = vunpack.c.l.b16 %v218
    %v227 = vunpack.c.l.b16 %v219
    %v228 = vunpack.c.l.b16 %v220
    %v229 = vpack.c.b16 %v226, %v225
    %v230 = vpack.c.b16 %v228, %v227
    %v234 = vsel %vm125, %v216, 0
    %236 = vmatprep.subr.bf16.mxu0 0
    %237 = vmatpush1.bf16.msra.mxu0 %v229
    %238 = vmatprep.subr.bf16.mxu0 0
    %239 = vmatpush1.bf16.msra.mxu0 %v230
    %240 = vmatprep.subr.bf16.mxu0 0
    %241 = vmatpush1.bf16.msra.mxu0 0
    %242 = vmatprep.subr.bf16.mxu0 0
    %243 = vmatpush1.bf16.msra.mxu0 0
    %244 = vmatprep.subr.bf16.mxu0 0
    %245 = vmatpush1.bf16.msra.mxu0 0
    %246 = vmatprep.subr.bf16.mxu0 0
    %247 = vmatpush1.bf16.msra.mxu0 0
    %248 = vmatprep.subr.bf16.mxu0 0
    %249 = vmatpush1.bf16.msra.mxu0 0
    %250 = vmatprep.subr.bf16.mxu0 0
    %251 = vmatpush1.bf16.msra.mxu0 0
    %252 = vmatprep.subr.bf16.mxu0 0
    %253 = vmatpush1.bf16.msra.mxu0 0
    %254 = vmatprep.subr.bf16.mxu0 0
    %255 = vmatpush1.bf16.msra.mxu0 0
    %256 = vmatprep.subr.bf16.mxu0 0
    %257 = vmatpush1.bf16.msra.mxu0 0
    %258 = vmatprep.subr.bf16.mxu0 0
    %259 = vmatpush1.bf16.msra.mxu0 0
    %260 = vmatprep.subr.bf16.mxu0 0
    %261 = vmatpush1.bf16.msra.mxu0 0
    %262 = vmatprep.subr.bf16.mxu0 0
    %263 = vmatpush1.bf16.msra.mxu0 0
    %264 = vmatprep.subr.bf16.mxu0 0
    %265 = vmatpush1.bf16.msra.mxu0 0
    %266 = vmatprep.subr.bf16.mxu0 0
    %267 = vmatpush1.bf16.msra.mxu0 0
    %268 = vmatprep.mubr.bf16.mxu0 0
    %269 = vmatmul.mubr.bf16.gmra.mrb[0].mxu0 %v234
    %v270 = vpop.f32.mrb[0].mxu0
    %v271 = vadd.f32 0.0, %v270
    %v272 = vpop.f32.mrb[0].mxu0
    %v273 = vpop.f32.mrb[0].mxu0
    %v274 = vpop.f32.mrb[0].mxu0
    %275 = vdwg.mxu0
    %v276 = vmul.f32 %v271, 0.17677669
    %v277 = vld [vmem:[%s7] sm:$0x3]
    %279 = vrot.lane.b32.xlu0 %v211, 96
    %v280 = vpop.permute.xlu0 %279
    %282 = vxpose.xlu0.b32.start [1/16] %v280, 128
    %283 = vxpose.xlu0.b32.cont [2/16] 0.0, 128
    %284 = vxpose.xlu0.b32.cont [3/16] 0.0, 128
    %285 = vxpose.xlu0.b32.cont [4/16] 0.0, 128
    %286 = vxpose.xlu0.b32.cont [5/16] 0.0, 128
    %287 = vxpose.xlu0.b32.cont [6/16] 0.0, 128
    %288 = vxpose.xlu0.b32.cont [7/16] 0.0, 128
    %289 = vxpose.xlu0.b32.cont [8/16] 0.0, 128
    %290 = vxpose.xlu0.b32.cont [9/16] 0.0, 128
    %291 = vxpose.xlu0.b32.cont [10/16] 0.0, 128
    %292 = vxpose.xlu0.b32.cont [11/16] 0.0, 128
    %293 = vxpose.xlu0.b32.cont [12/16] 0.0, 128
    %294 = vxpose.xlu0.b32.cont [13/16] 0.0, 128
    %295 = vxpose.xlu0.b32.cont [14/16] 0.0, 128
    %296 = vxpose.xlu0.b32.cont [15/16] 0.0, 128
    %297 = vxpose.xlu0.b32.end [16/16] 0.0, 128
    %v298 = vpop.trf.xlu0
    %v299 = vpop.trf.xlu0
    %v300 = vpop.trf.xlu0
    %v301 = vpop.trf.xlu0
    %v302 = vpop.trf.xlu0
    %v303 = vpop.trf.xlu0
    %v304 = vpop.trf.xlu0
    %v305 = vpop.trf.xlu0
    %v306 = vpop.trf.xlu0
    %v307 = vpop.trf.xlu0
    %v308 = vpop.trf.xlu0
    %v309 = vpop.trf.xlu0
    %v310 = vpop.trf.xlu0
    %v311 = vpop.trf.xlu0
    %v312 = vpop.trf.xlu0
    %v313 = vpop.trf.xlu0
    %v314 = vpack.c.bf16 %v299, %v298
    %v315 = vpack.c.bf16 %v301, %v300
    %v317 = vsel %vm125, %v277, 0
    %319 = vmatprep.subr.bf16.mxu0 0
    %320 = vmatpush1.bf16.msra.mxu0 %v314
    %321 = vmatprep.subr.bf16.mxu0 0
    %322 = vmatpush1.bf16.msra.mxu0 %v315
    %323 = vmatprep.subr.bf16.mxu0 0
    %324 = vmatpush1.bf16.msra.mxu0 0
    %325 = vmatprep.subr.bf16.mxu0 0
    %326 = vmatpush1.bf16.msra.mxu0 0
    %327 = vmatprep.subr.bf16.mxu0 0
    %328 = vmatpush1.bf16.msra.mxu0 0
    %329 = vmatprep.subr.bf16.mxu0 0
    %330 = vmatpush1.bf16.msra.mxu0 0
    %331 = vmatprep.subr.bf16.mxu0 0
    %332 = vmatpush1.bf16.msra.mxu0 0
    %333 = vmatprep.subr.bf16.mxu0 0
    %334 = vmatpush1.bf16.msra.mxu0 0
    %335 = vmatprep.subr.bf16.mxu0 0
    %336 = vmatpush1.bf16.msra.mxu0 0
    %337 = vmatprep.subr.bf16.mxu0 0
    %338 = vmatpush1.bf16.msra.mxu0 0
    %339 = vmatprep.subr.bf16.mxu0 0
    %340 = vmatpush1.bf16.msra.mxu0 0
    %341 = vmatprep.subr.bf16.mxu0 0
    %342 = vmatpush1.bf16.msra.mxu0 0
    %343 = vmatprep.subr.bf16.mxu0 0
    %344 = vmatpush1.bf16.msra.mxu0 0
    %345 = vmatprep.subr.bf16.mxu0 0
    %346 = vmatpush1.bf16.msra.mxu0 0
    %347 = vmatprep.subr.bf16.mxu0 0
    %348 = vmatpush1.bf16.msra.mxu0 0
    %349 = vmatprep.subr.bf16.mxu0 0
    %350 = vmatpush1.bf16.msra.mxu0 0
    %351 = vmatprep.mubr.bf16.mxu0 0
    %352 = vmatmul.mubr.bf16.gmra.mrb[0].mxu0 %v317
    %v353 = vpop.f32.mrb[0].mxu0
    %v354 = vadd.f32 0.0, %v353
    %v355 = vpop.f32.mrb[0].mxu0
    %v356 = vpop.f32.mrb[0].mxu0
    %v357 = vpop.f32.mrb[0].mxu0
    %358 = vdwg.mxu0
    %v359 = vpack.c.bf16 %v276, %v276
    %vm360 = vcmask 27648
    %361 = vst.msk [vmem:[%s10] sm:$0xf] %vm360, %v359
    %v362 = vpack.c.bf16 %v354, %v354
    %vm363 = vcmask 58368
    %364 = vst.msk [vmem:[#allocation2] sm:$0x3] %vm363, %v362
    %v365 = vld [vmem:[%s8] sm:$0x3]
    %v366 = vunpack.c.l.bf16 %v365
    %v367 = vld [vmem:[%s9] sm:$0x1]
    %v369 = vlaneseq
    %v370 = vshrl.u32 %v369, 7
    %v371 = vsub.s32 0, %v370
    %v372 = vrot.slane %v367, %v371
    %v374 = vmul.f32 %v366, %v372
    %vm375 = vcmask 257024
    %v376 = vsel %vm375, %v374, 0.0
    %377 = vadd.xlane.f32.xlu0 %v376
    %v378 = vpop.xlane.xlu0 %377
    %vm379 = vcmask 3072
    %380 = vst.msk [vmem:[%s12] sm:$0xf] %vm379, %v378
    // Predicated region
    $region42: #{tpu_custom_call.1} parent=1 // pred_check
      _
    $region43: #{tpu_custom_call.1} parent=1 // pred_check_branch
      %382 = sbr.rel (0) target = $region45
    $region44: #{tpu_custom_call.1} parent=1 // pred_region
      _
    $region45: #{tpu_custom_call.1} parent=1 // pred_fallthru
      _
    // Predicated region
    $region46: #{tpu_custom_call.1} parent=1 // pred_check
      _
    $region47: #{tpu_custom_call.1} parent=1 // pred_check_branch
      %384 = sbr.rel (0) target = $region49
    $region48: #{tpu_custom_call.1} parent=1 // pred_region
      %s386 = ssub.s32 32, 32
      %387 = vsyncadd [#allocation3], %s386
      %s389 = sshll.u32 [#allocation2], 4
      %s390 = int_to_ptr.vmem [resolvable:$true] %s389
      %392 = dma.vmem_to_hbm [thread:$0]  %s390, 32, %s11, [#allocation3]
    $region49: #{tpu_custom_call.1} parent=1 // pred_fallthru
      _
    // Predicated region
    $region50: #{tpu_custom_call.1} parent=1 // pred_check
      _
    $region51: #{tpu_custom_call.1} parent=1 // pred_check_branch
      %394 = sbr.rel (0) target = $region53
    $region52: #{tpu_custom_call.1} parent=1 // pred_region
      _
    $region53: #{tpu_custom_call.1} parent=1 // pred_fallthru
      _
    // Predicated region
    $region54: #{tpu_custom_call.1} parent=1 // pred_check
      _
    $region55: #{tpu_custom_call.1} parent=1 // pred_check_branch
      %396 = sbr.rel (0) target = $region57
    $region56: #{tpu_custom_call.1} parent=1 // pred_region
      _
    $region57: #{tpu_custom_call.1} parent=1 // pred_fallthru
      _
    // Predicated region
    $region58: #{tpu_custom_call.1} parent=1 // pred_check
      _
    $region59: #{tpu_custom_call.1} parent=1 // pred_check_branch
      %398 = sbr.rel (0) target = $region61
    $region60: #{tpu_custom_call.1} parent=1 // pred_region
      %399 = dma.done [#allocation3], 32
    $region61: #{tpu_custom_call.1} parent=1 // pred_fallthru
      _
    // Predicated region
    $region62: #{tpu_custom_call.1} parent=1 // pred_check
      _
    $region63: #{tpu_custom_call.1} parent=1 // pred_check_branch
      %401 = sbr.rel (0) target = $region65
    $region64: #{tpu_custom_call.1} parent=1 // pred_region
      _
    $region65: #{tpu_custom_call.1} parent=1 // pred_fallthru
      _
    %402 = vsyncpa [#allocation3], 1

</llo_original>
